<compile_context>
chip_gen: v7x
topology: tpu7x:2x2x1
jax: 0.10.0
libtpu: 0.0.40
codegen_flags: <defaults>
</compile_context>

<pallas_src>
import numpy as np
import jax
import jax.numpy as jnp
from jax.experimental import pallas as pl
from jax.experimental.pallas import tpu as pltpu

# ----- static configuration (mirrors ChannelGate.__init__) -------------------
B = 2                      # batch
C = 64                     # gate_channels
H = 16                     # spatial height
W = 16                     # spatial width
REDUCTION = 16             # reduction_ratio (PyTorch default)
HIDDEN = C // REDUCTION    # mlp hidden width = 4
HW = H * W                 # 256 (lane-dense: multiple of 128)

# Packed-weight slab layout: one (8, 128) f32 vreg, one DMA.
#   rows 0:HIDDEN        , cols 0:C          -> W1^T  (HIDDEN, C)
#   rows HIDDEN:2*HIDDEN , cols 0:C          -> W2    (HIDDEN, C)
#   row  0               , cols C:C+HIDDEN   -> b1    (HIDDEN,)
#   row  1               , cols C:2*C        -> 2*b2  (C,)  (b2 appears twice)
SLAB_SHAPE = (8, 128)
assert 2 * HIDDEN <= SLAB_SHAPE[0]
assert 2 * C <= SLAB_SHAPE[1] and C + HIDDEN <= SLAB_SHAPE[1]


# -------------------------------- kernel -------------------------------------
def _channel_gate_kernel(x_ref, w_ref, o_ref):
    """Fused full-window avg/max pool -> shared MLP -> sigmoid gate -> scale."""
    # ---- pooling: read x once; do NOT keep it live across the MLP ----------
    x = x_ref[...]                                    # (B, C, HW) f32 in VMEM
    avg = jnp.mean(x, axis=-1)                        # (B, C)
    mx = jnp.max(x, axis=-1)                          # (B, C)
    pooled = jnp.concatenate([avg, mx], axis=0)       # (2B, C): one MLP pass

    # ---- shared MLP, one pass over the stacked pools ------------------------
    # att = sum_j [relu(avg.W1[:,j]+b1[j]) + relu(max.W1[:,j]+b1[j])] * W2[j,:] + 2*b2
    att = jnp.broadcast_to(w_ref[1:2, C:2 * C], (B, C))       # start from 2*b2
    for j in range(HIDDEN):                                    # unrolled, 4 iters
        w1j = w_ref[j:j + 1, 0:C]                              # (1, C): col j of W1
        b1j = w_ref[0:1, C + j:C + j + 1]                      # (1, 1)
        hj = jnp.sum(pooled * w1j, axis=-1, keepdims=True) + b1j   # (2B, 1)
        hj = jnp.maximum(hj, 0.0)                              # ReLU
        hj = hj[:B] + hj[B:]                                   # avg branch + max branch
        w2j = w_ref[HIDDEN + j:HIDDEN + j + 1, 0:C]            # (1, C): row j of W2
        att = att + hj * w2j                                   # (B, C)

    scale = jax.nn.sigmoid(att)                                # (B, C)

    # ---- scaled output: re-read x from VMEM; lane-dense store (last dim 256)
    o_ref[...] = x_ref[...] * scale[:, :, None]


# -------------------------------- wrapper -------------------------------------
_FLOPS = (2 * B * C * HW                 # avg + max pools
          + 2 * (2 * B) * C * HIDDEN     # layer 1 over stacked pools
          + 2 * B * HIDDEN * C           # layer 2
          + B * C * HW)                  # final scale multiply
_BYTES = 2 * B * C * HW * 4 + SLAB_SHAPE[0] * SLAB_SHAPE[1] * 4


def channel_gate_forward(x, w_slab):
    """x: (B, C, H, W) f32, w_slab: packed (8,128) weights -> (B, C, H, W) f32."""
    x3 = x.reshape(B, C, HW)                          # contiguous reshape (free)
    vmem = pl.BlockSpec(memory_space=pltpu.MemorySpace.VMEM)   # whole array in VMEM
    out = pl.pallas_call(
        _channel_gate_kernel,
        out_shape=jax.ShapeDtypeStruct((B, C, HW), jnp.float32),
        in_specs=[vmem, vmem],
        out_specs=vmem,
        # output reuses x's HBM buffer (x tile is fully in VMEM before stores)
        input_output_aliases={0: 0},
        # let XLA overlap neighbours with this sub-microsecond custom call
        cost_estimate=pl.CostEstimate(
            flops=_FLOPS, transcendentals=B * C, bytes_accessed=_BYTES),
        # no grid: single invocation on one TensorCore (avoids grid overhead /
        # cross-core sync for this launch-bound op at B=2)
    )(x3, w_slab)
    return out.reshape(B, C, H, W)
    # TODO(synk): if this layer is called repeatedly, keep the weight slab
    # resident across calls (cross-call prefetch) instead of re-DMAing it.


# --------------------------- deterministic params -----------------------------
def init_params(key):
    k1, k2, k3, k4 = jax.random.split(key, 4)
    # torch nn.Linear(C, HIDDEN): weight (HIDDEN, C), bias (HIDDEN,)
    bound1 = 1.0 / np.sqrt(C)
    w1_t = jax.random.uniform(k1, (HIDDEN, C), jnp.float32, -bound1, bound1)
    b1 = jax.random.uniform(k2, (HIDDEN,), jnp.float32, -bound1, bound1)
    # torch nn.Linear(HIDDEN, C): weight (C, HIDDEN), bias (C,)
    bound2 = 1.0 / np.sqrt(HIDDEN)
    w2_t = jax.random.uniform(k3, (C, HIDDEN), jnp.float32, -bound2, bound2)
    b2 = jax.random.uniform(k4, (C,), jnp.float32, -bound2, bound2)

    # math form used everywhere: mlp(v) = relu(v @ W1 + b1) @ W2 + b2
    W1 = w1_t.T                                       # (C, HIDDEN)
    W2 = w2_t.T                                       # (HIDDEN, C)

    # pack everything into ONE lane-dense (8, 128) slab -> a single input DMA
    slab = jnp.zeros(SLAB_SHAPE, jnp.float32)
    slab = slab.at[0:HIDDEN, 0:C].set(w1_t)           # W1^T
    slab = slab.at[HIDDEN:2 * HIDDEN, 0:C].set(W2)    # W2
    slab = slab.at[0, C:C + HIDDEN].set(b1)           # b1
    slab = slab.at[1, C:2 * C].set(2.0 * b2)          # 2*b2 (bias counted twice)
    return dict(slab=slab, w1=W1, b1=b1, w2=W2, b2=b2)


# ----------------------------- pure-JAX reference ------------------------------
def reference_forward(x, params):
    hp = jax.lax.Precision.HIGHEST
    avg = jnp.mean(x, axis=(2, 3))                    # avg_pool2d + flatten
    mx = jnp.max(x, axis=(2, 3))                      # max_pool2d + flatten

    def mlp(v):
        h = jnp.maximum(jnp.dot(v, params["w1"], precision=hp) + params["b1"], 0.0)
        return jnp.dot(h, params["w2"], precision=hp) + params["b2"]

    scale = jax.nn.sigmoid(mlp(avg) + mlp(mx))        # (B, C)
    return x * scale[:, :, None, None]


if __name__ == "__main__":
    key = jax.random.PRNGKey(0)
    kp, kx = jax.random.split(key)
    params = init_params(kp)
    x = jax.random.normal(kx, (B, C, H, W), jnp.float32)

    # Reference first: x is donated to the fused kernel call below.
    ref = jax.block_until_ready(reference_forward(x, params))

    fwd = jax.jit(channel_gate_forward, donate_argnums=(0,))
    out = jax.block_until_ready(fwd(x, params["slab"]))

    assert out.shape == (B, C, H, W), out.shape
    np.testing.assert_allclose(np.asarray(out), np.asarray(ref), rtol=1e-3, atol=1e-3)
    print("KERNEL_OK")
</pallas_src>

<mosaic_0001>
module attributes {stable_mosaic.version = 11 : i64} {
  func.func @_channel_gate_kernel(%arg0: memref<2x64x256xf32, #tpu.memory_space<vmem>>, %arg1: memref<8x128xf32, #tpu.memory_space<vmem>>, %arg2: memref<2x64x256xf32, #tpu.memory_space<vmem>>) attributes {dimension_semantics = [], scalar_prefetch = 0 : i64, scratch_operands = 0 : i64, tpu.core_type = #tpu.core_type<tc>} {
    %c0 = arith.constant 0 : index
    %c0_0 = arith.constant 0 : index
    %c0_1 = arith.constant 0 : index
    %0 = vector.load %arg0[%c0, %c0_0, %c0_1] : memref<2x64x256xf32, #tpu.memory_space<vmem>>, vector<2x64x256xf32>
    %cst = arith.constant dense<0.000000e+00> : vector<2x64xf32>
    %1 = vector.multi_reduction <add>, %0, %cst [2] : vector<2x64x256xf32> to vector<2x64xf32>
    %cst_2 = arith.constant 2.560000e+02 : f32
    %2 = vector.broadcast %cst_2 : f32 to vector<2x64xf32>
    %3 = arith.divf %1, %2 : vector<2x64xf32>
    %cst_3 = arith.constant dense<0xFF800000> : vector<2x64xf32>
    %4 = vector.multi_reduction <maximumf>, %0, %cst_3 [2] : vector<2x64x256xf32> to vector<2x64xf32>
    %5 = tpu.concatenate %3, %4 in 0 : vector<2x64xf32>, vector<2x64xf32> -> vector<4x64xf32>
    %c1 = arith.constant 1 : index
    %c64 = arith.constant 64 : index
    %6 = vector.load %arg1[%c1, %c64] : memref<8x128xf32, #tpu.memory_space<vmem>>, vector<1x64xf32>
    %7 = vector.shape_cast %6 : vector<1x64xf32> to vector<1x64xf32>
    %8 = vector.broadcast %7 : vector<1x64xf32> to vector<2x64xf32>
    %c0_4 = arith.constant 0 : index
    %c0_5 = arith.constant 0 : index
    %9 = vector.load %arg1[%c0_4, %c0_5] : memref<8x128xf32, #tpu.memory_space<vmem>>, vector<1x64xf32>
    %c0_6 = arith.constant 0 : index
    %c64_7 = arith.constant 64 : index
    %10 = vector.load %arg1[%c0_6, %c64_7] : memref<8x128xf32, #tpu.memory_space<vmem>>, vector<1x1xf32>
    %11 = vector.broadcast %9 : vector<1x64xf32> to vector<4x64xf32>
    %12 = arith.mulf %5, %11 : vector<4x64xf32>
    %cst_8 = arith.constant dense<0.000000e+00> : vector<4xf32>
    %13 = vector.multi_reduction <add>, %12, %cst_8 [1] : vector<4x64xf32> to vector<4xf32>
    %14 = vector.shape_cast %13 : vector<4xf32> to vector<4x1xf32>
    %15 = vector.broadcast %10 : vector<1x1xf32> to vector<4x1xf32>
    %16 = arith.addf %14, %15 : vector<4x1xf32>
    %cst_9 = arith.constant 0.000000e+00 : f32
    %17 = vector.broadcast %cst_9 : f32 to vector<4x1xf32>
    %18 = arith.maximumf %16, %17 : vector<4x1xf32>
    %19 = vector.extract_strided_slice %18 {offsets = [0, 0], sizes = [2, 1], strides = [1, 1]} : vector<4x1xf32> to vector<2x1xf32>
    %20 = vector.extract_strided_slice %18 {offsets = [2, 0], sizes = [2, 1], strides = [1, 1]} : vector<4x1xf32> to vector<2x1xf32>
    %21 = arith.addf %19, %20 : vector<2x1xf32>
    %c4 = arith.constant 4 : index
    %c0_10 = arith.constant 0 : index
    %22 = vector.load %arg1[%c4, %c0_10] : memref<8x128xf32, #tpu.memory_space<vmem>>, vector<1x64xf32>
    %23 = vector.broadcast %21 : vector<2x1xf32> to vector<2x64xf32>
    %24 = vector.broadcast %22 : vector<1x64xf32> to vector<2x64xf32>
    %25 = arith.mulf %23, %24 : vector<2x64xf32>
    %26 = arith.addf %8, %25 : vector<2x64xf32>
    %c1_11 = arith.constant 1 : index
    %c0_12 = arith.constant 0 : index
    %27 = vector.load %arg1[%c1_11, %c0_12] : memref<8x128xf32, #tpu.memory_space<vmem>>, vector<1x64xf32>
    %c0_13 = arith.constant 0 : index
    %c65 = arith.constant 65 : index
    %28 = vector.load %arg1[%c0_13, %c65] : memref<8x128xf32, #tpu.memory_space<vmem>>, vector<1x1xf32>
    %29 = vector.broadcast %27 : vector<1x64xf32> to vector<4x64xf32>
    %30 = arith.mulf %5, %29 : vector<4x64xf32>
    %cst_14 = arith.constant dense<0.000000e+00> : vector<4xf32>
    %31 = vector.multi_reduction <add>, %30, %cst_14 [1] : vector<4x64xf32> to vector<4xf32>
    %32 = vector.shape_cast %31 : vector<4xf32> to vector<4x1xf32>
    %33 = vector.broadcast %28 : vector<1x1xf32> to vector<4x1xf32>
    %34 = arith.addf %32, %33 : vector<4x1xf32>
    %cst_15 = arith.constant 0.000000e+00 : f32
    %35 = vector.broadcast %cst_15 : f32 to vector<4x1xf32>
    %36 = arith.maximumf %34, %35 : vector<4x1xf32>
    %37 = vector.extract_strided_slice %36 {offsets = [0, 0], sizes = [2, 1], strides = [1, 1]} : vector<4x1xf32> to vector<2x1xf32>
    %38 = vector.extract_strided_slice %36 {offsets = [2, 0], sizes = [2, 1], strides = [1, 1]} : vector<4x1xf32> to vector<2x1xf32>
    %39 = arith.addf %37, %38 : vector<2x1xf32>
    %c5 = arith.constant 5 : index
    %c0_16 = arith.constant 0 : index
    %40 = vector.load %arg1[%c5, %c0_16] : memref<8x128xf32, #tpu.memory_space<vmem>>, vector<1x64xf32>
    %41 = vector.broadcast %39 : vector<2x1xf32> to vector<2x64xf32>
    %42 = vector.broadcast %40 : vector<1x64xf32> to vector<2x64xf32>
    %43 = arith.mulf %41, %42 : vector<2x64xf32>
    %44 = arith.addf %26, %43 : vector<2x64xf32>
    %c2 = arith.constant 2 : index
    %c0_17 = arith.constant 0 : index
    %45 = vector.load %arg1[%c2, %c0_17] : memref<8x128xf32, #tpu.memory_space<vmem>>, vector<1x64xf32>
    %c0_18 = arith.constant 0 : index
    %c66 = arith.constant 66 : index
    %46 = vector.load %arg1[%c0_18, %c66] : memref<8x128xf32, #tpu.memory_space<vmem>>, vector<1x1xf32>
    %47 = vector.broadcast %45 : vector<1x64xf32> to vector<4x64xf32>
    %48 = arith.mulf %5, %47 : vector<4x64xf32>
    %cst_19 = arith.constant dense<0.000000e+00> : vector<4xf32>
    %49 = vector.multi_reduction <add>, %48, %cst_19 [1] : vector<4x64xf32> to vector<4xf32>
    %50 = vector.shape_cast %49 : vector<4xf32> to vector<4x1xf32>
    %51 = vector.broadcast %46 : vector<1x1xf32> to vector<4x1xf32>
    %52 = arith.addf %50, %51 : vector<4x1xf32>
    %cst_20 = arith.constant 0.000000e+00 : f32
    %53 = vector.broadcast %cst_20 : f32 to vector<4x1xf32>
    %54 = arith.maximumf %52, %53 : vector<4x1xf32>
    %55 = vector.extract_strided_slice %54 {offsets = [0, 0], sizes = [2, 1], strides = [1, 1]} : vector<4x1xf32> to vector<2x1xf32>
    %56 = vector.extract_strided_slice %54 {offsets = [2, 0], sizes = [2, 1], strides = [1, 1]} : vector<4x1xf32> to vector<2x1xf32>
    %57 = arith.addf %55, %56 : vector<2x1xf32>
    %c6 = arith.constant 6 : index
    %c0_21 = arith.constant 0 : index
    %58 = vector.load %arg1[%c6, %c0_21] : memref<8x128xf32, #tpu.memory_space<vmem>>, vector<1x64xf32>
    %59 = vector.broadcast %57 : vector<2x1xf32> to vector<2x64xf32>
    %60 = vector.broadcast %58 : vector<1x64xf32> to vector<2x64xf32>
    %61 = arith.mulf %59, %60 : vector<2x64xf32>
    %62 = arith.addf %44, %61 : vector<2x64xf32>
    %c3 = arith.constant 3 : index
    %c0_22 = arith.constant 0 : index
    %63 = vector.load %arg1[%c3, %c0_22] : memref<8x128xf32, #tpu.memory_space<vmem>>, vector<1x64xf32>
    %c0_23 = arith.constant 0 : index
    %c67 = arith.constant 67 : index
    %64 = vector.load %arg1[%c0_23, %c67] : memref<8x128xf32, #tpu.memory_space<vmem>>, vector<1x1xf32>
    %65 = vector.broadcast %63 : vector<1x64xf32> to vector<4x64xf32>
    %66 = arith.mulf %5, %65 : vector<4x64xf32>
    %cst_24 = arith.constant dense<0.000000e+00> : vector<4xf32>
    %67 = vector.multi_reduction <add>, %66, %cst_24 [1] : vector<4x64xf32> to vector<4xf32>
    %68 = vector.shape_cast %67 : vector<4xf32> to vector<4x1xf32>
    %69 = vector.broadcast %64 : vector<1x1xf32> to vector<4x1xf32>
    %70 = arith.addf %68, %69 : vector<4x1xf32>
    %cst_25 = arith.constant 0.000000e+00 : f32
    %71 = vector.broadcast %cst_25 : f32 to vector<4x1xf32>
    %72 = arith.maximumf %70, %71 : vector<4x1xf32>
    %73 = vector.extract_strided_slice %72 {offsets = [0, 0], sizes = [2, 1], strides = [1, 1]} : vector<4x1xf32> to vector<2x1xf32>
    %74 = vector.extract_strided_slice %72 {offsets = [2, 0], sizes = [2, 1], strides = [1, 1]} : vector<4x1xf32> to vector<2x1xf32>
    %75 = arith.addf %73, %74 : vector<2x1xf32>
    %c7 = arith.constant 7 : index
    %c0_26 = arith.constant 0 : index
    %76 = vector.load %arg1[%c7, %c0_26] : memref<8x128xf32, #tpu.memory_space<vmem>>, vector<1x64xf32>
    %77 = vector.broadcast %75 : vector<2x1xf32> to vector<2x64xf32>
    %78 = vector.broadcast %76 : vector<1x64xf32> to vector<2x64xf32>
    %79 = arith.mulf %77, %78 : vector<2x64xf32>
    %80 = arith.addf %62, %79 : vector<2x64xf32>
    %81 = arith.negf %80 : vector<2x64xf32>
    %82 = math.exp %81 : vector<2x64xf32>
    %cst_27 = arith.constant 1.000000e+00 : f32
    %83 = vector.broadcast %cst_27 : f32 to vector<2x64xf32>
    %84 = arith.addf %83, %82 : vector<2x64xf32>
    %85 = arith.divf %83, %84 : vector<2x64xf32>
    %c0_28 = arith.constant 0 : index
    %c0_29 = arith.constant 0 : index
    %c0_30 = arith.constant 0 : index
    %86 = vector.load %arg0[%c0_28, %c0_29, %c0_30] : memref<2x64x256xf32, #tpu.memory_space<vmem>>, vector<2x64x256xf32>
    %87 = vector.shape_cast %85 : vector<2x64xf32> to vector<2x64x1xf32>
    %88 = vector.broadcast %87 : vector<2x64x1xf32> to vector<2x64x256xf32>
    %89 = arith.mulf %86, %88 : vector<2x64x256xf32>
    %c0_31 = arith.constant 0 : index
    %c0_32 = arith.constant 0 : index
    %c0_33 = arith.constant 0 : index
    %90 = vector.load %arg2[%c0_31, %c0_32, %c0_33] : memref<2x64x256xf32, #tpu.memory_space<vmem>>, vector<2x64x256xf32>
    tpu.vector_store %arg2[%c0_31, %c0_32, %c0_33], %89 {strides = array<i32>} : memref<2x64x256xf32, #tpu.memory_space<vmem>>, vector<2x64x256xf32>,
    return
  }
}

</mosaic_0001>

<llo_original>
// kernel: channel_gate_forward.1
$region0: #{channel_gate_forward.1}
  #allocation0 [shape = 'u32[]', space=smem, size = 0x4, offset = 0x4, fixed_abs, tag = 'smem constant byte address 0x4 - core index']
  #allocation1 [shape = 'u32[144,128]{1,0:T(1,128)}', space=vmem, size = 0x12000, scoped, tag = 'internal scratch']
  %s0 = inlined_call_operand.vmem [shape: f32[2,64,256], index: 0, kind: input, shape index: {}, may-alias: {0,2}]
  %s1 = inlined_call_operand.vmem [shape: f32[8,128], index: 1, kind: input, shape index: {}]
  %s2 = inlined_call_operand.vmem [shape: f32[2,64,256], index: 2, kind: output, shape index: {}, may-alias: {0,2}]
  %s3 = sld [smem:[#allocation0]]
  $region18: #{channel_gate_forward.1} parent=0
    _
  %s5 = ssub.s32 1, %s3
  %s6 = scalar_select 0, %s5, %s3
  // Predicated region
  $region2: #{channel_gate_forward.1} parent=0 // pred_check
    _
  $region3: #{channel_gate_forward.1} parent=0 // pred_check_branch
    %8 = sbr.rel (0) target = $region5
  $region4: #{channel_gate_forward.1} parent=0 // pred_region
    _
  $region5: #{channel_gate_forward.1} parent=0 // pred_fallthru
    _
  // Predicated region
  $region6: #{channel_gate_forward.1} parent=0 // pred_check
    _
  $region7: #{channel_gate_forward.1} parent=0 // pred_check_branch
    %10 = sbr.rel (0) target = $region9
  $region8: #{channel_gate_forward.1} parent=0 // pred_region
    _
  $region9: #{channel_gate_forward.1} parent=0 // pred_fallthru
    _
  %v11 = vld [vmem:[%s0] sm:$0xff]
  %v12 = vld [vmem:[%s0 + $0x8] sm:$0xff]
  %v13 = vld [vmem:[%s0 + $0x10] sm:$0xff]
  %v14 = vld [vmem:[%s0 + $0x18] sm:$0xff]
  %v15 = vld [vmem:[%s0 + $0x20] sm:$0xff]
  %v16 = vld [vmem:[%s0 + $0x28] sm:$0xff]
  %v17 = vld [vmem:[%s0 + $0x30] sm:$0xff]
  %v18 = vld [vmem:[%s0 + $0x38] sm:$0xff]
  %v19 = vld [vmem:[%s0 + $0x40] sm:$0xff]
  %v20 = vld [vmem:[%s0 + $0x48] sm:$0xff]
  %v21 = vld [vmem:[%s0 + $0x50] sm:$0xff]
  %v22 = vld [vmem:[%s0 + $0x58] sm:$0xff]
  %v23 = vld [vmem:[%s0 + $0x60] sm:$0xff]
  %v24 = vld [vmem:[%s0 + $0x68] sm:$0xff]
  %v25 = vld [vmem:[%s0 + $0x70] sm:$0xff]
  %v26 = vld [vmem:[%s0 + $0x78] sm:$0xff]
  %v27 = vld [vmem:[%s0 + $0x80] sm:$0xff]
  %v28 = vld [vmem:[%s0 + $0x88] sm:$0xff]
  %v29 = vld [vmem:[%s0 + $0x90] sm:$0xff]
  %v30 = vld [vmem:[%s0 + $0x98] sm:$0xff]
  %v31 = vld [vmem:[%s0 + $0xa0] sm:$0xff]
  %v32 = vld [vmem:[%s0 + $0xa8] sm:$0xff]
  %v33 = vld [vmem:[%s0 + $0xb0] sm:$0xff]
  %v34 = vld [vmem:[%s0 + $0xb8] sm:$0xff]
  %v35 = vld [vmem:[%s0 + $0xc0] sm:$0xff]
  %v36 = vld [vmem:[%s0 + $0xc8] sm:$0xff]
  %v37 = vld [vmem:[%s0 + $0xd0] sm:$0xff]
  %v38 = vld [vmem:[%s0 + $0xd8] sm:$0xff]
  %v39 = vld [vmem:[%s0 + $0xe0] sm:$0xff]
  %v40 = vld [vmem:[%s0 + $0xe8] sm:$0xff]
  %v41 = vld [vmem:[%s0 + $0xf0] sm:$0xff]
  %v42 = vld [vmem:[%s0 + $0xf8] sm:$0xff]
  %v43 = vadd.f32 %v11, %v12
  %44 = vadd.xlane.f32.xlu0 %v43
  %v45 = vpop.xlane.xlu0 %44
  %v46 = vadd.f32 %v13, %v14
  %47 = vadd.xlane.f32.xlu0 %v46
  %v48 = vpop.xlane.xlu0 %47
  %v49 = vadd.f32 %v15, %v16
  %50 = vadd.xlane.f32.xlu0 %v49
  %v51 = vpop.xlane.xlu0 %50
  %v52 = vadd.f32 %v17, %v18
  %53 = vadd.xlane.f32.xlu0 %v52
  %v54 = vpop.xlane.xlu0 %53
  %v55 = vadd.f32 %v19, %v20
  %56 = vadd.xlane.f32.xlu0 %v55
  %v57 = vpop.xlane.xlu0 %56
  %v58 = vadd.f32 %v21, %v22
  %59 = vadd.xlane.f32.xlu0 %v58
  %v60 = vpop.xlane.xlu0 %59
  %v61 = vadd.f32 %v23, %v24
  %62 = vadd.xlane.f32.xlu0 %v61
  %v63 = vpop.xlane.xlu0 %62
  %v64 = vadd.f32 %v25, %v26
  %65 = vadd.xlane.f32.xlu0 %v64
  %v66 = vpop.xlane.xlu0 %65
  %v67 = vadd.f32 %v27, %v28
  %68 = vadd.xlane.f32.xlu0 %v67
  %v69 = vpop.xlane.xlu0 %68
  %v70 = vadd.f32 %v29, %v30
  %71 = vadd.xlane.f32.xlu0 %v70
  %v72 = vpop.xlane.xlu0 %71
  %v73 = vadd.f32 %v31, %v32
  %74 = vadd.xlane.f32.xlu0 %v73
  %v75 = vpop.xlane.xlu0 %74
  %v76 = vadd.f32 %v33, %v34
  %77 = vadd.xlane.f32.xlu0 %v76
  %v78 = vpop.xlane.xlu0 %77
  %v79 = vadd.f32 %v35, %v36
  %80 = vadd.xlane.f32.xlu0 %v79
  %v81 = vpop.xlane.xlu0 %80
  %v82 = vadd.f32 %v37, %v38
  %83 = vadd.xlane.f32.xlu0 %v82
  %v84 = vpop.xlane.xlu0 %83
  %v85 = vadd.f32 %v39, %v40
  %86 = vadd.xlane.f32.xlu0 %v85
  %v87 = vpop.xlane.xlu0 %86
  %v88 = vadd.f32 %v41, %v42
  %89 = vadd.xlane.f32.xlu0 %v88
  %v90 = vpop.xlane.xlu0 %89
  %v91 = vrcp.pop 256.0
  %v92 = vmul.f32 %v45, %v91
  %v93 = vmul.f32 %v48, %v91
  %v94 = vmul.f32 %v51, %v91
  %v95 = vmul.f32 %v54, %v91
  %v96 = vmul.f32 %v57, %v91
  %v97 = vmul.f32 %v60, %v91
  %v98 = vmul.f32 %v63, %v91
  %v99 = vmul.f32 %v66, %v91
  %v100 = vmul.f32 %v69, %v91
  %v101 = vmul.f32 %v72, %v91
  %v102 = vmul.f32 %v75, %v91
  %v103 = vmul.f32 %v78, %v91
  %v104 = vmul.f32 %v81, %v91
  %v105 = vmul.f32 %v84, %v91
  %v106 = vmul.f32 %v87, %v91
  %v107 = vmul.f32 %v90, %v91
  %v108 = vmax.f32 %v11, %v12
  %109 = vmax.xlane.f32.xlu0 %v108
  %v110 = vpop.xlane.xlu0 %109
  %v111 = vmax.f32 %v13, %v14
  %112 = vmax.xlane.f32.xlu0 %v111
  %v113 = vpop.xlane.xlu0 %112
  %v114 = vmax.f32 %v15, %v16
  %115 = vmax.xlane.f32.xlu0 %v114
  %v116 = vpop.xlane.xlu0 %115
  %v117 = vmax.f32 %v17, %v18
  %118 = vmax.xlane.f32.xlu0 %v117
  %v119 = vpop.xlane.xlu0 %118
  %v120 = vmax.f32 %v19, %v20
  %121 = vmax.xlane.f32.xlu0 %v120
  %v122 = vpop.xlane.xlu0 %121
  %v123 = vmax.f32 %v21, %v22
  %124 = vmax.xlane.f32.xlu0 %v123
  %v125 = vpop.xlane.xlu0 %124
  %v126 = vmax.f32 %v23, %v24
  %127 = vmax.xlane.f32.xlu0 %v126
  %v128 = vpop.xlane.xlu0 %127
  %v129 = vmax.f32 %v25, %v26
  %130 = vmax.xlane.f32.xlu0 %v129
  %v131 = vpop.xlane.xlu0 %130
  %v132 = vmax.f32 %v27, %v28
  %133 = vmax.xlane.f32.xlu0 %v132
  %v134 = vpop.xlane.xlu0 %133
  %v135 = vmax.f32 %v29, %v30
  %136 = vmax.xlane.f32.xlu0 %v135
  %v137 = vpop.xlane.xlu0 %136
  %v138 = vmax.f32 %v31, %v32
  %139 = vmax.xlane.f32.xlu0 %v138
  %v140 = vpop.xlane.xlu0 %139
  %v141 = vmax.f32 %v33, %v34
  %142 = vmax.xlane.f32.xlu0 %v141
  %v143 = vpop.xlane.xlu0 %142
  %v144 = vmax.f32 %v35, %v36
  %145 = vmax.xlane.f32.xlu0 %v144
  %v146 = vpop.xlane.xlu0 %145
  %v147 = vmax.f32 %v37, %v38
  %148 = vmax.xlane.f32.xlu0 %v147
  %v149 = vpop.xlane.xlu0 %148
  %v150 = vmax.f32 %v39, %v40
  %151 = vmax.xlane.f32.xlu0 %v150
  %v152 = vpop.xlane.xlu0 %151
  %v153 = vmax.f32 %v41, %v42
  %154 = vmax.xlane.f32.xlu0 %v153
  %v155 = vpop.xlane.xlu0 %154
  %v172 = vlaneseq
  %v173 = vand.u32 %v172, 127
  %v174 = vlaneseq
  %v175 = vshrl.u32 %v174, 7
  %v176 = vsub.s32 %v173, %v175
  %v177 = vrot.slane %v92, %v176
  %v178 = vadd.s32 %v173, 4294967288
  %v179 = vlaneseq
  %v180 = vshrl.u32 %v179, 7
  %v181 = vsub.s32 %v178, %v180
  %v182 = vrot.slane %v93, %v181
  %vm183 = vcmask 130112
  %v184 = vsel %vm183, %v182, %v177
  %v185 = vadd.s32 %v173, 4294967280
  %v186 = vlaneseq
  %v187 = vshrl.u32 %v186, 7
  %v188 = vsub.s32 %v185, %v187
  %v189 = vrot.slane %v94, %v188
  %vm190 = vcmask 195712
  %v191 = vsel %vm190, %v189, %v184
  %v192 = vadd.s32 %v173, 4294967272
  %v193 = vlaneseq
  %v194 = vshrl.u32 %v193, 7
  %v195 = vsub.s32 %v192, %v194
  %v196 = vrot.slane %v95, %v195
  %vm197 = vcmask 261312
  %v198 = vsel %vm197, %v196, %v191
  %v199 = vadd.s32 %v173, 4294967264
  %v200 = vlaneseq
  %v201 = vshrl.u32 %v200, 7
  %v202 = vsub.s32 %v199, %v201
  %v203 = vrot.slane %v96, %v202
  %vm204 = vcmask 326912
  %v205 = vsel %vm204, %v203, %v198
  %v206 = vadd.s32 %v173, 4294967256
  %v207 = vlaneseq
  %v208 = vshrl.u32 %v207, 7
  %v209 = vsub.s32 %v206, %v208
  %v210 = vrot.slane %v97, %v209
  %vm211 = vcmask 392512
  %v212 = vsel %vm211, %v210, %v205
  %v213 = vadd.s32 %v173, 4294967248
  %v214 = vlaneseq
  %v215 = vshrl.u32 %v214, 7
  %v216 = vsub.s32 %v213, %v215
  %v217 = vrot.slane %v98, %v216
  %vm218 = vcmask 458112
  %v219 = vsel %vm218, %v217, %v212
  %v220 = vadd.s32 %v173, 4294967240
  %v221 = vlaneseq
  %v222 = vshrl.u32 %v221, 7
  %v223 = vsub.s32 %v220, %v222
  %v224 = vrot.slane %v99, %v223
  %vm225 = vcmask 523712
  %v226 = vsel %vm225, %v224, %v219
  %v227 = vlaneseq
  %v228 = vshrl.u32 %v227, 7
  %v229 = vsub.s32 %v173, %v228
  %v230 = vrot.slane %v100, %v229
  %v231 = vlaneseq
  %v232 = vshrl.u32 %v231, 7
  %v233 = vsub.s32 %v178, %v232
  %v234 = vrot.slane %v101, %v233
  %v235 = vsel %vm183, %v234, %v230
  %v236 = vlaneseq
  %v237 = vshrl.u32 %v236, 7
  %v238 = vsub.s32 %v185, %v237
  %v239 = vrot.slane %v102, %v238
  %v240 = vsel %vm190, %v239, %v235
  %v241 = vlaneseq
  %v242 = vshrl.u32 %v241, 7
  %v243 = vsub.s32 %v192, %v242
  %v244 = vrot.slane %v103, %v243
  %v245 = vsel %vm197, %v244, %v240
  %v246 = vlaneseq
  %v247 = vshrl.u32 %v246, 7
  %v248 = vsub.s32 %v199, %v247
  %v249 = vrot.slane %v104, %v248
  %v250 = vsel %vm204, %v249, %v245
  %v251 = vlaneseq
  %v252 = vshrl.u32 %v251, 7
  %v253 = vsub.s32 %v206, %v252
  %v254 = vrot.slane %v105, %v253
  %v255 = vsel %vm211, %v254, %v250
  %v256 = vlaneseq
  %v257 = vshrl.u32 %v256, 7
  %v258 = vsub.s32 %v213, %v257
  %v259 = vrot.slane %v106, %v258
  %v260 = vsel %vm218, %v259, %v255
  %v261 = vlaneseq
  %v262 = vshrl.u32 %v261, 7
  %v263 = vsub.s32 %v220, %v262
  %v264 = vrot.slane %v107, %v263
  %v265 = vsel %vm225, %v264, %v260
  %vm266 = vcmask 1041409
  %v267 = vsel %vm266, %v265, %v226
  %v285 = vlaneseq
  %v286 = vshrl.u32 %v285, 7
  %v287 = vsub.s32 %v173, %v286
  %v288 = vrot.slane %v110, %v287
  %v289 = vlaneseq
  %v290 = vshrl.u32 %v289, 7
  %v291 = vsub.s32 %v178, %v290
  %v292 = vrot.slane %v113, %v291
  %v293 = vsel %vm183, %v292, %v288
  %v294 = vlaneseq
  %v295 = vshrl.u32 %v294, 7
  %v296 = vsub.s32 %v185, %v295
  %v297 = vrot.slane %v116, %v296
  %v298 = vsel %vm190, %v297, %v293
  %v299 = vlaneseq
  %v300 = vshrl.u32 %v299, 7
  %v301 = vsub.s32 %v192, %v300
  %v302 = vrot.slane %v119, %v301
  %v303 = vsel %vm197, %v302, %v298
  %v304 = vlaneseq
  %v305 = vshrl.u32 %v304, 7
  %v306 = vsub.s32 %v199, %v305
  %v307 = vrot.slane %v122, %v306
  %v308 = vsel %vm204, %v307, %v303
  %v309 = vlaneseq
  %v310 = vshrl.u32 %v309, 7
  %v311 = vsub.s32 %v206, %v310
  %v312 = vrot.slane %v125, %v311
  %v313 = vsel %vm211, %v312, %v308
  %v314 = vlaneseq
  %v315 = vshrl.u32 %v314, 7
  %v316 = vsub.s32 %v213, %v315
  %v317 = vrot.slane %v128, %v316
  %v318 = vsel %vm218, %v317, %v313
  %v319 = vlaneseq
  %v320 = vshrl.u32 %v319, 7
  %v321 = vsub.s32 %v220, %v320
  %v322 = vrot.slane %v131, %v321
  %v323 = vsel %vm225, %v322, %v318
  %v324 = vlaneseq
  %v325 = vshrl.u32 %v324, 7
  %v326 = vsub.s32 %v173, %v325
  %v327 = vrot.slane %v134, %v326
  %v328 = vlaneseq
  %v329 = vshrl.u32 %v328, 7
  %v330 = vsub.s32 %v178, %v329
  %v331 = vrot.slane %v137, %v330
  %v332 = vsel %vm183, %v331, %v327
  %v333 = vlaneseq
  %v334 = vshrl.u32 %v333, 7
  %v335 = vsub.s32 %v185, %v334
  %v336 = vrot.slane %v140, %v335
  %v337 = vsel %vm190, %v336, %v332
  %v338 = vlaneseq
  %v339 = vshrl.u32 %v338, 7
  %v340 = vsub.s32 %v192, %v339
  %v341 = vrot.slane %v143, %v340
  %v342 = vsel %vm197, %v341, %v337
  %v343 = vlaneseq
  %v344 = vshrl.u32 %v343, 7
  %v345 = vsub.s32 %v199, %v344
  %v346 = vrot.slane %v146, %v345
  %v347 = vsel %vm204, %v346, %v342
  %v348 = vlaneseq
  %v349 = vshrl.u32 %v348, 7
  %v350 = vsub.s32 %v206, %v349
  %v351 = vrot.slane %v149, %v350
  %v352 = vsel %vm211, %v351, %v347
  %v353 = vlaneseq
  %v354 = vshrl.u32 %v353, 7
  %v355 = vsub.s32 %v213, %v354
  %v356 = vrot.slane %v152, %v355
  %v357 = vsel %vm218, %v356, %v352
  %v358 = vlaneseq
  %v359 = vshrl.u32 %v358, 7
  %v360 = vsub.s32 %v220, %v359
  %v361 = vrot.slane %v155, %v360
  %v362 = vsel %vm225, %v361, %v357
  %vm363 = vcmask 1043459
  %v364 = vsel %vm363, %v362, %v323
  %vm366 = vcmask 1041408
  %v367 = vsel %vm366, %v267, %v364
  %v368 = vld [vmem:[%s1 + $0x1] sm:$0x1]
  %v369 = vlaneseq
  %v370 = vshrl.u32 %v369, 7
  %v371 = vsub.s32 0, %v370
  %v372 = vrot.slane %v368, %v371
  %v373 = vld [vmem:[%s1] sm:$0x1]
  %v374 = vlaneseq
  %v375 = vshrl.u32 %v374, 7
  %v376 = vsub.s32 0, %v375
  %v377 = vrot.slane %v373, %v376
  %v378 = vmul.f32 %v367, %v377
  %vm379 = vcmask 519168
  %v380 = vsel %vm379, %v378, 0.0
  %381 = vadd.xlane.f32.xlu0 %v380
  %v382 = vpop.xlane.xlu0 %381
  %v383 = vadd.f32 %v382, %v377
  %v384 = vmax.f32 %v383, 0.0
  %v386 = vrot.slane %v384, 2
  %v388 = vadd.f32 %v384, %v386
  %v389 = vld [vmem:[%s1 + $0x4] sm:$0x1]
  %391 = vset.pattern.permute.xlu0 64
  %392 = vperm.xlu0 %391, %v388
  %v393 = vpop.permute.xlu0 %392
  %v395 = vlaneseq
  %v396 = vshrl.u32 %v395, 7
  %v397 = vsub.s32 0, %v396
  %v398 = vrot.slane %v389, %v397
  %v399 = vmul.f32 %v393, %v398
  %401 = vrot.lane.b32.xlu0 %v399, 64
  %v402 = vpop.permute.xlu0 %401
  %v404 = vadd.f32 %v372, %v402
  %v405 = vmul.f32 %v367, %v372
  %v406 = vsel %vm379, %v405, 0.0
  %407 = vadd.xlane.f32.xlu0 %v406
  %v408 = vpop.xlane.xlu0 %407
  %v409 = vadd.f32 %v408, %v377
  %v410 = vmax.f32 %v409, 0.0
  %v412 = vrot.slane %v410, 2
  %v414 = vadd.f32 %v410, %v412
  %v415 = vld [vmem:[%s1 + $0x5] sm:$0x1]
  %417 = vset.pattern.permute.xlu0 65
  %418 = vperm.xlu0 %417, %v414
  %v419 = vpop.permute.xlu0 %418
  %v421 = vlaneseq
  %v422 = vshrl.u32 %v421, 7
  %v423 = vsub.s32 0, %v422
  %v424 = vrot.slane %v415, %v423
  %v425 = vmul.f32 %v419, %v424
  %427 = vrot.lane.b32.xlu0 %v425, 64
  %v428 = vpop.permute.xlu0 %427
  %v430 = vadd.f32 %v404, %v428
  %v431 = vld [vmem:[%s1 + $0x2] sm:$0x1]
  %v432 = vlaneseq
  %v433 = vshrl.u32 %v432, 7
  %v434 = vsub.s32 0, %v433
  %v435 = vrot.slane %v431, %v434
  %v436 = vmul.f32 %v367, %v435
  %v437 = vsel %vm379, %v436, 0.0
  %438 = vadd.xlane.f32.xlu0 %v437
  %v439 = vpop.xlane.xlu0 %438
  %v440 = vadd.f32 %v439, %v377
  %v441 = vmax.f32 %v440, 0.0
  %v443 = vrot.slane %v441, 2
  %v445 = vadd.f32 %v441, %v443
  %v446 = vld [vmem:[%s1 + $0x6] sm:$0x1]
  %448 = vset.pattern.permute.xlu0 66
  %449 = vperm.xlu0 %448, %v445
  %v450 = vpop.permute.xlu0 %449
  %v452 = vlaneseq
  %v453 = vshrl.u32 %v452, 7
  %v454 = vsub.s32 0, %v453
  %v455 = vrot.slane %v446, %v454
  %v456 = vmul.f32 %v450, %v455
  %458 = vrot.lane.b32.xlu0 %v456, 64
  %v459 = vpop.permute.xlu0 %458
  %v461 = vadd.f32 %v430, %v459
  %v462 = vld [vmem:[%s1 + $0x3] sm:$0x1]
  %v463 = vlaneseq
  %v464 = vshrl.u32 %v463, 7
  %v465 = vsub.s32 0, %v464
  %v466 = vrot.slane %v462, %v465
  %v467 = vmul.f32 %v367, %v466
  %v468 = vsel %vm379, %v467, 0.0
  %469 = vadd.xlane.f32.xlu0 %v468
  %v470 = vpop.xlane.xlu0 %469
  %v471 = vadd.f32 %v470, %v377
  %v472 = vmax.f32 %v471, 0.0
  %v474 = vrot.slane %v472, 2
  %v476 = vadd.f32 %v472, %v474
  %v477 = vld [vmem:[%s1 + $0x7] sm:$0x1]
  %479 = vset.pattern.permute.xlu0 67
  %480 = vperm.xlu0 %479, %v476
  %v481 = vpop.permute.xlu0 %480
  %v483 = vlaneseq
  %v484 = vshrl.u32 %v483, 7
  %v485 = vsub.s32 0, %v484
  %v486 = vrot.slane %v477, %v485
  %v487 = vmul.f32 %v481, %v486
  %489 = vrot.lane.b32.xlu0 %v487, 64
  %v490 = vpop.permute.xlu0 %489
  %v492 = vadd.f32 %v461, %v490
  %v493 = vxor.u32 %v492, 2147483648
  %v494 = vmul.f32 %v493, 1.442695
  %v495 = vpow.pop %v494
  %v496 = vadd.f32 %v495, 1.0
  %v497 = vrcp.pop %v496
  %v498 = vmul.f32 1.0, %v497
  %v499 = vlaneseq
  %v500 = vshrl.u32 %v499, 7
  %v501 = vsub.s32 0, %v500
  %v502 = vrot.slane %v498, %v501
  %s504 = sor.u32 256, 64
  %505 = vbcast.lane.b32.xlu0 %v502, %s504
  %v506 = vpop.permute.xlu0 %505
  %s508 = sor.u32 256, 72
  %509 = vbcast.lane.b32.xlu0 %v502, %s508
  %v510 = vpop.permute.xlu0 %509
  %s512 = sor.u32 256, 80
  %513 = vbcast.lane.b32.xlu0 %v502, %s512
  %v514 = vpop.permute.xlu0 %513
  %s516 = sor.u32 256, 88
  %517 = vbcast.lane.b32.xlu0 %v502, %s516
  %v518 = vpop.permute.xlu0 %517
  %s520 = sor.u32 256, 96
  %521 = vbcast.lane.b32.xlu0 %v502, %s520
  %v522 = vpop.permute.xlu0 %521
  %s524 = sor.u32 256, 104
  %525 = vbcast.lane.b32.xlu0 %v502, %s524
  %v526 = vpop.permute.xlu0 %525
  %s528 = sor.u32 256, 112
  %529 = vbcast.lane.b32.xlu0 %v502, %s528
  %v530 = vpop.permute.xlu0 %529
  %s532 = sor.u32 256, 120
  %533 = vbcast.lane.b32.xlu0 %v502, %s532
  %v534 = vpop.permute.xlu0 %533
  %v535 = vlaneseq
  %v536 = vshrl.u32 %v535, 7
  %v537 = vsub.s32 1, %v536
  %v538 = vrot.slane %v498, %v537
  %s540 = sor.u32 256, 64
  %541 = vbcast.lane.b32.xlu0 %v538, %s540
  %v542 = vpop.permute.xlu0 %541
  %s544 = sor.u32 256, 72
  %545 = vbcast.lane.b32.xlu0 %v538, %s544
  %v546 = vpop.permute.xlu0 %545
  %s548 = sor.u32 256, 80
  %549 = vbcast.lane.b32.xlu0 %v538, %s548
  %v550 = vpop.permute.xlu0 %549
  %s552 = sor.u32 256, 88
  %553 = vbcast.lane.b32.xlu0 %v538, %s552
  %v554 = vpop.permute.xlu0 %553
  %s556 = sor.u32 256, 96
  %557 = vbcast.lane.b32.xlu0 %v538, %s556
  %v558 = vpop.permute.xlu0 %557
  %s560 = sor.u32 256, 104
  %561 = vbcast.lane.b32.xlu0 %v538, %s560
  %v562 = vpop.permute.xlu0 %561
  %s564 = sor.u32 256, 112
  %565 = vbcast.lane.b32.xlu0 %v538, %s564
  %v566 = vpop.permute.xlu0 %565
  %s568 = sor.u32 256, 120
  %569 = vbcast.lane.b32.xlu0 %v538, %s568
  %v570 = vpop.permute.xlu0 %569
  %v571 = vmul.f32 %v11, %v506
  %v572 = vmul.f32 %v12, %v506
  %v573 = vmul.f32 %v13, %v510
  %v574 = vmul.f32 %v14, %v510
  %v575 = vmul.f32 %v15, %v514
  %v576 = vmul.f32 %v16, %v514
  %v577 = vmul.f32 %v17, %v518
  %v578 = vmul.f32 %v18, %v518
  %v579 = vmul.f32 %v19, %v522
  %v580 = vmul.f32 %v20, %v522
  %v581 = vmul.f32 %v21, %v526
  %v582 = vmul.f32 %v22, %v526
  %v583 = vmul.f32 %v23, %v530
  %v584 = vmul.f32 %v24, %v530
  %v585 = vmul.f32 %v25, %v534
  %v586 = vmul.f32 %v26, %v534
  %v587 = vmul.f32 %v27, %v542
  %v588 = vmul.f32 %v28, %v542
  %v589 = vmul.f32 %v29, %v546
  %v590 = vmul.f32 %v30, %v546
  %v591 = vmul.f32 %v31, %v550
  %v592 = vmul.f32 %v32, %v550
  %v593 = vmul.f32 %v33, %v554
  %v594 = vmul.f32 %v34, %v554
  %v595 = vmul.f32 %v35, %v558
  %v596 = vmul.f32 %v36, %v558
  %v597 = vmul.f32 %v37, %v562
  %v598 = vmul.f32 %v38, %v562
  %v599 = vmul.f32 %v39, %v566
  %v600 = vmul.f32 %v40, %v566
  %v601 = vmul.f32 %v41, %v570
  %v602 = vmul.f32 %v42, %v570
  %603 = vst [vmem:[%s2] sm:$0xff] %v571
  %604 = vst [vmem:[%s2 + $0x8] sm:$0xff] %v572
  %605 = vst [vmem:[%s2 + $0x10] sm:$0xff] %v573
  %606 = vst [vmem:[%s2 + $0x18] sm:$0xff] %v574
  %607 = vst [vmem:[%s2 + $0x20] sm:$0xff] %v575
  %608 = vst [vmem:[%s2 + $0x28] sm:$0xff] %v576
  %609 = vst [vmem:[%s2 + $0x30] sm:$0xff] %v577
  %610 = vst [vmem:[%s2 + $0x38] sm:$0xff] %v578
  %611 = vst [vmem:[%s2 + $0x40] sm:$0xff] %v579
  %612 = vst [vmem:[%s2 + $0x48] sm:$0xff] %v580
  %613 = vst [vmem:[%s2 + $0x50] sm:$0xff] %v581
  %614 = vst [vmem:[%s2 + $0x58] sm:$0xff] %v582
  %615 = vst [vmem:[%s2 + $0x60] sm:$0xff] %v583
  %616 = vst [vmem:[%s2 + $0x68] sm:$0xff] %v584
  %617 = vst [vmem:[%s2 + $0x70] sm:$0xff] %v585
  %618 = vst [vmem:[%s2 + $0x78] sm:$0xff] %v586
  %619 = vst [vmem:[%s2 + $0x80] sm:$0xff] %v587
  %620 = vst [vmem:[%s2 + $0x88] sm:$0xff] %v588
  %621 = vst [vmem:[%s2 + $0x90] sm:$0xff] %v589
  %622 = vst [vmem:[%s2 + $0x98] sm:$0xff] %v590
  %623 = vst [vmem:[%s2 + $0xa0] sm:$0xff] %v591
  %624 = vst [vmem:[%s2 + $0xa8] sm:$0xff] %v592
  %625 = vst [vmem:[%s2 + $0xb0] sm:$0xff] %v593
  %626 = vst [vmem:[%s2 + $0xb8] sm:$0xff] %v594
  %627 = vst [vmem:[%s2 + $0xc0] sm:$0xff] %v595
  %628 = vst [vmem:[%s2 + $0xc8] sm:$0xff] %v596
  %629 = vst [vmem:[%s2 + $0xd0] sm:$0xff] %v597
  %630 = vst [vmem:[%s2 + $0xd8] sm:$0xff] %v598
  %631 = vst [vmem:[%s2 + $0xe0] sm:$0xff] %v599
  %632 = vst [vmem:[%s2 + $0xe8] sm:$0xff] %v600
  %633 = vst [vmem:[%s2 + $0xf0] sm:$0xff] %v601
  %634 = vst [vmem:[%s2 + $0xf8] sm:$0xff] %v602
  // Predicated region
  $region10: #{channel_gate_forward.1} parent=0 // pred_check
    _
  $region11: #{channel_gate_forward.1} parent=0 // pred_check_branch
    %636 = sbr.rel (0) target = $region13
  $region12: #{channel_gate_forward.1} parent=0 // pred_region
    _
  $region13: #{channel_gate_forward.1} parent=0 // pred_fallthru
    _
  // Predicated region
  $region14: #{channel_gate_forward.1} parent=0 // pred_check
    _
  $region15: #{channel_gate_forward.1} parent=0 // pred_check_branch
    %638 = sbr.rel (0) target = $region17
  $region16: #{channel_gate_forward.1} parent=0 // pred_region
    _
  $region17: #{channel_gate_forward.1} parent=0 // pred_fallthru
    _

</llo_original>
